<compile_context>
chip_gen: v7x
topology: tpu7x:2x2x1
jax: 0.10.0
libtpu: 0.0.40
codegen_flags: <defaults>
</compile_context>

<pallas_src>
import jax
import jax.numpy as jnp
from jax.experimental import pallas as pl
from jax.experimental.pallas import tpu as pltpu

RGB_SPLIT = 1024  # hard-coded split point in the PyTorch module


def _interp_matrix(in_size: int, out_size: int) -> jnp.ndarray:
    """PyTorch F.interpolate(mode='bilinear', align_corners=False) as a [out, in] matrix."""
    o = jnp.arange(out_size, dtype=jnp.float32)
    scale = in_size / out_size
    src = jnp.maximum((o + 0.5) * scale - 0.5, 0.0)
    i0 = jnp.minimum(jnp.floor(src).astype(jnp.int32), in_size - 1)
    i1 = jnp.minimum(i0 + 1, in_size - 1)
    w1 = src - i0.astype(jnp.float32)
    w0 = 1.0 - w1
    rows = jnp.arange(out_size)
    w = jnp.zeros((out_size, in_size), jnp.float32)
    w = w.at[rows, i0].add(w0)
    w = w.at[rows, i1].add(w1)
    return w


def _fusion_kernel(rgb_ref, of_ref, wh_ref, ww_ref, mask_ref, out_ref):
    # rgb_ref : (1, Tp, 1024)  lane-dense (1024 on lanes)
    # of_ref  : (1, T, C_of)
    # wh_ref  : (1024, C_of)   channel-resize weights (constant across grid)
    # ww_ref  : (T, Tp)        time-resize weights    (constant across grid)
    # mask_ref: (1, T, 1)
    # out_ref : (1, T, 2*C_of) lane-dense (channels on lanes)
    tp = rgb_ref.shape[1]

    rgb = rgb_ref[0]                                                      # (Tp, 1024)
    # Channel-axis bilinear resize on the MXU: contraction over the 1024 lanes.
    tmp = jnp.dot(rgb, wh_ref[...], preferred_element_type=jnp.float32)   # (Tp, C_of)

    # Time-axis resize: K == Tp (typically 2) -> unrolled VPU broadcast-FMAs, no MXU.
    ww = ww_ref[...]                                                      # (T, Tp)
    rgb_i = ww[:, 0:1] * tmp[0:1, :]                                      # (T, C_of)
    for p in range(1, tp):
        rgb_i = rgb_i + ww[:, p:p + 1] * tmp[p:p + 1, :]

    mask = mask_ref[0]                                                    # (T, 1)
    of = of_ref[0].astype(jnp.float32)                                    # (T, C_of)
    combined = jnp.concatenate([rgb_i, of], axis=-1) * mask               # (T, 2*C_of)
    out_ref[0] = combined.astype(out_ref.dtype)                           # single full store


def ipb_fusion_neck(x: jnp.ndarray, masks: jnp.ndarray, *, gop_size: int = 15) -> jnp.ndarray:
    """x: [N, 1024 + C_of, T] float32; masks: [N, 1, T] -> [N, 2*C_of, T] float32."""
    n, c, t = x.shape
    c_of = c - RGB_SPLIT
    assert c_of > 0, "combine mode expects >1024 channels"

    # --- XLA glue: slice + transpose to lane-dense layouts ------------------------
    rgb_sub_t = jnp.transpose(x[:, :RGB_SPLIT, ::gop_size], (0, 2, 1))  # [N, Tp, 1024]
    of_t = jnp.transpose(x[:, RGB_SPLIT:, :], (0, 2, 1))                # [N, T, C_of]
    masks_t = jnp.transpose(masks.astype(jnp.float32), (0, 2, 1))       # [N, T, 1]
    tp = rgb_sub_t.shape[1]

    wh_t = _interp_matrix(RGB_SPLIT, c_of).T                            # [1024, C_of]
    ww = _interp_matrix(tp, t)                                          # [T, Tp]

    out_t = pl.pallas_call(
        _fusion_kernel,
        out_shape=jax.ShapeDtypeStruct((n, t, 2 * c_of), jnp.float32),
        grid_spec=pltpu.PrefetchScalarGridSpec(
            num_scalar_prefetch=0,
            grid=(n,),
            in_specs=[
                pl.BlockSpec((1, tp, RGB_SPLIT), lambda b: (b, 0, 0)),   # rgb (lane-dense)
                pl.BlockSpec((1, t, c_of), lambda b: (b, 0, 0)),         # of
                pl.BlockSpec((RGB_SPLIT, c_of), lambda b: (0, 0)),       # wh (resident)
                pl.BlockSpec((t, tp), lambda b: (0, 0)),                 # ww (resident)
                pl.BlockSpec((1, t, 1), lambda b: (b, 0, 0)),            # mask
            ],
            out_specs=pl.BlockSpec((1, t, 2 * c_of), lambda b: (b, 0, 0)),
        ),
        compiler_params=pltpu.CompilerParams(dimension_semantics=("parallel",)),
    )(rgb_sub_t, of_t, wh_t, ww, masks_t)

    # back to the PyTorch [N, 2*C_of, T] layout
    return jnp.transpose(out_t, (0, 2, 1))


def _reference(x, masks, gop_size=15):
    n, c, t = x.shape
    c_of = c - RGB_SPLIT
    rgb_sub = x[:, :RGB_SPLIT, ::gop_size]
    of_feat = x[:, RGB_SPLIT:, :]
    tp = rgb_sub.shape[-1]
    wh = _interp_matrix(RGB_SPLIT, c_of)
    ww = _interp_matrix(tp, t)
    rgb_i = jnp.einsum("oc,nct,wt->now", wh, rgb_sub, ww)
    return jnp.concatenate([rgb_i, of_feat], axis=1) * masks


if __name__ == "__main__":
    key = jax.random.PRNGKey(0)
    k1, k2 = jax.random.split(key)

    N, C_OF, T, GOP = 2, 32, 30, 15
    x = jax.random.normal(k1, (N, RGB_SPLIT + C_OF, T), dtype=jnp.float32)
    masks = (jax.random.uniform(k2, (N, 1, T)) < 0.8).astype(jnp.float32)

    out = ipb_fusion_neck(x, masks, gop_size=GOP)
    out = jax.block_until_ready(out)

    ref = _reference(x, masks, gop_size=GOP)
    assert out.shape == (N, 2 * C_OF, T), out.shape
    assert jnp.allclose(out, ref, atol=1e-4, rtol=1e-4), float(jnp.max(jnp.abs(out - ref)))
    print("KERNEL_OK")
</pallas_src>

<mosaic_0001>
module attributes {stable_mosaic.version = 11 : i64} {
  func.func @_fusion_kernel(%arg0: i32, %arg1: memref<1x2x1024xf32, #tpu.memory_space<vmem>>, %arg2: memref<1x30x32xf32, #tpu.memory_space<vmem>>, %arg3: memref<1024x32xf32, #tpu.memory_space<vmem>>, %arg4: memref<30x2xf32, #tpu.memory_space<vmem>>, %arg5: memref<1x30x1xf32, #tpu.memory_space<vmem>>, %arg6: memref<1x30x64xf32, #tpu.memory_space<vmem>>) attributes {dimension_semantics = [#tpu.dimension_semantics<parallel>], iteration_bounds = array<i64: 2>, scalar_prefetch = 0 : i64, scratch_operands = 0 : i64, tpu.core_type = #tpu.core_type<tc>, window_params = [{transform_indices = @transform_0, window_bounds = array<i64: 1, 2, 1024>}, {transform_indices = @transform_1, window_bounds = array<i64: 1, 30, 32>}, {pipeline_mode = #tpu.pipeline_mode<synchronous>, transform_indices = @transform_2, window_bounds = array<i64: 1024, 32>}, {pipeline_mode = #tpu.pipeline_mode<synchronous>, transform_indices = @transform_3, window_bounds = array<i64: 30, 2>}, {transform_indices = @transform_4, window_bounds = array<i64: 1, 30, 1>}, {transform_indices = @transform_5, window_bounds = array<i64: 1, 30, 64>}]} {
    %c0 = arith.constant 0 : index
    %c0_0 = arith.constant 0 : index
    %c0_1 = arith.constant 0 : index
    %0 = vector.load %arg1[%c0, %c0_0, %c0_1] : memref<1x2x1024xf32, #tpu.memory_space<vmem>>, vector<1x2x1024xf32>
    %1 = vector.shape_cast %0 : vector<1x2x1024xf32> to vector<2x1024xf32>
    %c0_2 = arith.constant 0 : index
    %c0_3 = arith.constant 0 : index
    %2 = vector.load %arg3[%c0_2, %c0_3] : memref<1024x32xf32, #tpu.memory_space<vmem>>, vector<1024x32xf32>
    %cst = arith.constant dense<0.000000e+00> : vector<2x32xf32>
    %3 = tpu.matmul %1, %2, %cst {dimension_numbers = #tpu.dot_dimension_numbers<[1], [0], [0], [1], [0, 0, 1, 1], [], []>} : vector<2x1024xf32>, vector<1024x32xf32>, vector<2x32xf32> -> vector<2x32xf32>
    %c0_4 = arith.constant 0 : index
    %c0_5 = arith.constant 0 : index
    %4 = vector.load %arg4[%c0_4, %c0_5] : memref<30x2xf32, #tpu.memory_space<vmem>>, vector<30x2xf32>
    %5 = vector.extract_strided_slice %4 {offsets = [0, 0], sizes = [30, 1], strides = [1, 1]} : vector<30x2xf32> to vector<30x1xf32>
    %6 = vector.extract_strided_slice %3 {offsets = [0, 0], sizes = [1, 32], strides = [1, 1]} : vector<2x32xf32> to vector<1x32xf32>
    %7 = vector.broadcast %5 : vector<30x1xf32> to vector<30x32xf32>
    %8 = vector.broadcast %6 : vector<1x32xf32> to vector<30x32xf32>
    %9 = arith.mulf %7, %8 : vector<30x32xf32>
    %10 = vector.extract_strided_slice %4 {offsets = [0, 1], sizes = [30, 1], strides = [1, 1]} : vector<30x2xf32> to vector<30x1xf32>
    %11 = vector.extract_strided_slice %3 {offsets = [1, 0], sizes = [1, 32], strides = [1, 1]} : vector<2x32xf32> to vector<1x32xf32>
    %12 = vector.broadcast %10 : vector<30x1xf32> to vector<30x32xf32>
    %13 = vector.broadcast %11 : vector<1x32xf32> to vector<30x32xf32>
    %14 = arith.mulf %12, %13 : vector<30x32xf32>
    %15 = arith.addf %9, %14 : vector<30x32xf32>
    %c0_6 = arith.constant 0 : index
    %c0_7 = arith.constant 0 : index
    %c0_8 = arith.constant 0 : index
    %16 = vector.load %arg5[%c0_6, %c0_7, %c0_8] : memref<1x30x1xf32, #tpu.memory_space<vmem>>, vector<1x30x1xf32>
    %17 = vector.shape_cast %16 : vector<1x30x1xf32> to vector<30x1xf32>
    %c0_9 = arith.constant 0 : index
    %c0_10 = arith.constant 0 : index
    %c0_11 = arith.constant 0 : index
    %18 = vector.load %arg2[%c0_9, %c0_10, %c0_11] : memref<1x30x32xf32, #tpu.memory_space<vmem>>, vector<1x30x32xf32>
    %19 = vector.shape_cast %18 : vector<1x30x32xf32> to vector<30x32xf32>
    %20 = tpu.concatenate %15, %19 in 1 : vector<30x32xf32>, vector<30x32xf32> -> vector<30x64xf32>
    %21 = vector.broadcast %17 : vector<30x1xf32> to vector<30x64xf32>
    %22 = arith.mulf %20, %21 : vector<30x64xf32>
    %c0_12 = arith.constant 0 : index
    %c0_13 = arith.constant 0 : index
    %c0_14 = arith.constant 0 : index
    %23 = vector.load %arg6[%c0_12, %c0_13, %c0_14] : memref<1x30x64xf32, #tpu.memory_space<vmem>>, vector<1x30x64xf32>
    %24 = vector.shape_cast %23 : vector<1x30x64xf32> to vector<30x64xf32>
    %25 = vector.shape_cast %22 : vector<30x64xf32> to vector<1x30x64xf32>
    tpu.vector_store %arg6[%c0_12, %c0_13, %c0_14], %25 {strides = array<i32>} : memref<1x30x64xf32, #tpu.memory_space<vmem>>, vector<1x30x64xf32>,
    return
  }
  func.func @transform_0(%arg0: i32) -> (i32, i32, i32) {
    %c0_i32 = arith.constant 0 : i32
    %c0_i32_0 = arith.constant 0 : i32
    %c0_i32_1 = arith.constant 0 : i32
    return %arg0, %c0_i32, %c0_i32_0 : i32, i32, i32
  }
  func.func @transform_1(%arg0: i32) -> (i32, i32, i32) {
    %c0_i32 = arith.constant 0 : i32
    %c0_i32_0 = arith.constant 0 : i32
    %c0_i32_1 = arith.constant 0 : i32
    return %arg0, %c0_i32, %c0_i32_0 : i32, i32, i32
  }
  func.func @transform_2(%arg0: i32) -> (i32, i32) {
    %c0_i32 = arith.constant 0 : i32
    %c0_i32_0 = arith.constant 0 : i32
    %c0_i32_1 = arith.constant 0 : i32
    return %c0_i32, %c0_i32_0 : i32, i32
  }
  func.func @transform_3(%arg0: i32) -> (i32, i32) {
    %c0_i32 = arith.constant 0 : i32
    %c0_i32_0 = arith.constant 0 : i32
    %c0_i32_1 = arith.constant 0 : i32
    return %c0_i32, %c0_i32_0 : i32, i32
  }
  func.func @transform_4(%arg0: i32) -> (i32, i32, i32) {
    %c0_i32 = arith.constant 0 : i32
    %c0_i32_0 = arith.constant 0 : i32
    %c0_i32_1 = arith.constant 0 : i32
    return %arg0, %c0_i32, %c0_i32_0 : i32, i32, i32
  }
  func.func @transform_5(%arg0: i32) -> (i32, i32, i32) {
    %c0_i32 = arith.constant 0 : i32
    %c0_i32_0 = arith.constant 0 : i32
    %c0_i32_1 = arith.constant 0 : i32
    return %arg0, %c0_i32, %c0_i32_0 : i32, i32, i32
  }
}

</mosaic_0001>

<llo_original>
// kernel: tpu_custom_call.1
$region0: #{tpu_custom_call.1}
  #allocation0 [shape = 'u32[]', space=smem, size = 0x4, offset = 0x4, fixed_abs, tag = 'smem constant byte address 0x4 - core index']
  #allocation1 [shape = 'u32[144,128]{1,0:T(1,128)}', space=vmem, size = 0x12000, scoped, tag = 'internal scratch']
  %s0 = inlined_call_operand.vmem [shape: f32[2,2,1024], index: 0, kind: input, shape index: {}]
  %s1 = inlined_call_operand.vmem [shape: f32[2,30,32], index: 1, kind: input, shape index: {}]
  %s2 = inlined_call_operand.vmem [shape: f32[1024,32], index: 2, kind: input, shape index: {}]
  %s3 = inlined_call_operand.vmem [shape: f32[30,2], index: 3, kind: input, shape index: {}]
  %s4 = inlined_call_operand.vmem [shape: f32[2,30,1], index: 4, kind: input, shape index: {}]
  %s5 = inlined_call_operand.vmem [shape: f32[2,30,64], index: 5, kind: output, shape index: {}]
  %s6 = sld [smem:[#allocation0]]
  $region53: #{tpu_custom_call.1} parent=0
    _
  %s8 = ssub.s32 1, %s6
  %s9 = scalar_select 0, %s8, %s6
  loop: start=0, step=1, limit=4
  $region2: #{tpu_custom_call.1} parent=0 // loop_pre_header
    _
  $region3: #{tpu_custom_call.1} parent=0 // loop_header
    %s11 = sphi 0, %s15
    %p12 = scmp.ge.s32.totalorder %s11, 4
    %s21 = sphi 0, %s23
    %s24 = sphi 0, %s21
    %s25 = sphi 0, %s24
    %s41 = sphi 0, %s25
    %s47 = sphi 0, %s49
    %s50 = sphi 0, %s47
    %s51 = sphi 0, %s50
    %s67 = sphi 0, %s51
    %s71 = sphi 0, %s71
    %s73 = sphi 0, %s71
    %s74 = sphi 0, %s73
    %s88 = sphi 0, %s74
    %s92 = sphi 0, %s92
    %s94 = sphi 0, %s92
    %s95 = sphi 0, %s94
    %s109 = sphi 0, %s95
    %s115 = sphi 0, %s117
    %s118 = sphi 0, %s115
    %s119 = sphi 0, %s118
    %s135 = sphi 0, %s119
    %s141 = sphi 0, %s143
    %s144 = sphi 0, %s141
    %s145 = sphi 0, %s144
    %s161 = sphi 0, %s145
  $region4: #{tpu_custom_call.1} parent=0 // loop_header_branch
    %14 = sbr.rel (%p12) target = $region8
  $region5: #{tpu_custom_call.1} parent=0 // loop_body
    %s16 = ssub.s32 %s11, 1
    %s17 = ssub.s32 %s11, 2
    %s18 = sadd.s32 %s11, 1
    %s19 = ssub.s32 %s11, %s18
    %p20 = scmp.eq.s32.totalorder %s19, 0
    %s22 = sadd.s32 %s21, 1
    %s23 = scalar_select %p20, %s21, %s22
    %p26 = pneg %p20
    %p27 = scmp.eq.s32.totalorder %s11, 1
    %p28 = por %p26, %p27
    %p29 = scmp.ne.s32.totalorder %s21, %s24
    %p30 = scmp.eq.s32.totalorder %s11, 0
    %p31 = por %p29, %p30
    %p32 = scmp.ne.s32.totalorder %s21, %s24
    %p33 = scmp.eq.s32.totalorder %s16, 1
    %p34 = por %p32, %p33
    %p35 = scmp.ne.s32.totalorder %s24, %s25
    %p36 = scmp.eq.s32.totalorder %s16, 0
    %p37 = por %p35, %p36
    %p38 = scmp.ne.s32.totalorder %s24, %s25
    %p39 = scmp.eq.s32.totalorder %s17, 1
    %p40 = por %p38, %p39
    %p42 = scmp.ne.s32.totalorder %s25, %s41
    %p43 = scmp.eq.s32.totalorder %s17, 0
    %p44 = por %p42, %p43
    %s45 = ssub.s32 %s11, %s18
    %p46 = scmp.eq.s32.totalorder %s45, 0
    %s48 = sadd.s32 %s47, 1
    %s49 = scalar_select %p46, %s47, %s48
    %p52 = pneg %p46
    %p53 = scmp.eq.s32.totalorder %s11, 1
    %p54 = por %p52, %p53
    %p55 = scmp.ne.s32.totalorder %s47, %s50
    %p56 = scmp.eq.s32.totalorder %s11, 0
    %p57 = por %p55, %p56
    %p58 = scmp.ne.s32.totalorder %s47, %s50
    %p59 = scmp.eq.s32.totalorder %s16, 1
    %p60 = por %p58, %p59
    %p61 = scmp.ne.s32.totalorder %s50, %s51
    %p62 = scmp.eq.s32.totalorder %s16, 0
    %p63 = por %p61, %p62
    %p64 = scmp.ne.s32.totalorder %s50, %s51
    %p65 = scmp.eq.s32.totalorder %s17, 1
    %p66 = por %p64, %p65
    %p68 = scmp.ne.s32.totalorder %s51, %s67
    %p69 = scmp.eq.s32.totalorder %s17, 0
    %p70 = por %p68, %p69
    %s72 = sadd.s32 %s71, 1
    %p75 = scmp.eq.s32.totalorder %s11, 1
    %p76 = scmp.ne.s32.totalorder %s71, %s73
    %p77 = scmp.eq.s32.totalorder %s11, 0
    %p78 = por %p76, %p77
    %p79 = scmp.ne.s32.totalorder %s71, %s73
    %p80 = scmp.eq.s32.totalorder %s16, 1
    %p81 = por %p79, %p80
    %p82 = scmp.ne.s32.totalorder %s73, %s74
    %p83 = scmp.eq.s32.totalorder %s16, 0
    %p84 = por %p82, %p83
    %p85 = scmp.ne.s32.totalorder %s73, %s74
    %p86 = scmp.eq.s32.totalorder %s17, 1
    %p87 = por %p85, %p86
    %p89 = scmp.ne.s32.totalorder %s74, %s88
    %p90 = scmp.eq.s32.totalorder %s17, 0
    %p91 = por %p89, %p90
    %s93 = sadd.s32 %s92, 1
    %p96 = scmp.eq.s32.totalorder %s11, 1
    %p97 = scmp.ne.s32.totalorder %s92, %s94
    %p98 = scmp.eq.s32.totalorder %s11, 0
    %p99 = por %p97, %p98
    %p100 = scmp.ne.s32.totalorder %s92, %s94
    %p101 = scmp.eq.s32.totalorder %s16, 1
    %p102 = por %p100, %p101
    %p103 = scmp.ne.s32.totalorder %s94, %s95
    %p104 = scmp.eq.s32.totalorder %s16, 0
    %p105 = por %p103, %p104
    %p106 = scmp.ne.s32.totalorder %s94, %s95
    %p107 = scmp.eq.s32.totalorder %s17, 1
    %p108 = por %p106, %p107
    %p110 = scmp.ne.s32.totalorder %s95, %s109
    %p111 = scmp.eq.s32.totalorder %s17, 0
    %p112 = por %p110, %p111
    %s113 = ssub.s32 %s11, %s18
    %p114 = scmp.eq.s32.totalorder %s113, 0
    %s116 = sadd.s32 %s115, 1
    %s117 = scalar_select %p114, %s115, %s116
    %p120 = pneg %p114
    %p121 = scmp.eq.s32.totalorder %s11, 1
    %p122 = por %p120, %p121
    %p123 = scmp.ne.s32.totalorder %s115, %s118
    %p124 = scmp.eq.s32.totalorder %s11, 0
    %p125 = por %p123, %p124
    %p126 = scmp.ne.s32.totalorder %s115, %s118
    %p127 = scmp.eq.s32.totalorder %s16, 1
    %p128 = por %p126, %p127
    %p129 = scmp.ne.s32.totalorder %s118, %s119
    %p130 = scmp.eq.s32.totalorder %s16, 0
    %p131 = por %p129, %p130
    %p132 = scmp.ne.s32.totalorder %s118, %s119
    %p133 = scmp.eq.s32.totalorder %s17, 1
    %p134 = por %p132, %p133
    %p136 = scmp.ne.s32.totalorder %s119, %s135
    %p137 = scmp.eq.s32.totalorder %s17, 0
    %p138 = por %p136, %p137
    %s139 = ssub.s32 %s11, %s18
    %p140 = scmp.eq.s32.totalorder %s139, 0
    %s142 = sadd.s32 %s141, 1
    %s143 = scalar_select %p140, %s141, %s142
    %p146 = pneg %p140
    %p147 = scmp.eq.s32.totalorder %s11, 1
    %p148 = por %p146, %p147
    %p149 = scmp.ne.s32.totalorder %s141, %s144
    %p150 = scmp.eq.s32.totalorder %s11, 0
    %p151 = por %p149, %p150
    %p152 = scmp.ne.s32.totalorder %s141, %s144
    %p153 = scmp.eq.s32.totalorder %s16, 1
    %p154 = por %p152, %p153
    %p155 = scmp.ne.s32.totalorder %s144, %s145
    %p156 = scmp.eq.s32.totalorder %s16, 0
    %p157 = por %p155, %p156
    %p158 = scmp.ne.s32.totalorder %s144, %s145
    %p159 = scmp.eq.s32.totalorder %s17, 1
    %p160 = por %p158, %p159
    %p162 = scmp.ne.s32.totalorder %s145, %s161
    %p163 = scmp.eq.s32.totalorder %s17, 0
    %p164 = por %p162, %p163
    %p165 = scmp.le.s32.totalorder 1, %s11
    %p166 = scmp.lt.s32.totalorder %s11, 3
    %p167 = pnand %p165, %p166
    %p168 = pneg %p167
    // Predicated region
    $region9: #{tpu_custom_call.1} parent=5 // pred_check
      _
    $region10: #{tpu_custom_call.1} parent=5 // pred_check_branch
      %170 = sbr.rel (%p167) target = $region12
    $region11: #{tpu_custom_call.1} parent=5 // pred_region
      %s171 = ssub.s32 %s11, 1
      // Predicated region
      $region13: #{tpu_custom_call.1} parent=11 // pred_check
        %p172 = pneg %p84
      $region14: #{tpu_custom_call.1} parent=11 // pred_check_branch
        %174 = sbr.rel (%p172) target = $region16
      $region15: #{tpu_custom_call.1} parent=11 // pred_region
        _
      $region16: #{tpu_custom_call.1} parent=11 // pred_fallthru
        _
      // Predicated region
      $region17: #{tpu_custom_call.1} parent=11 // pred_check
        %p175 = pneg %p105
      $region18: #{tpu_custom_call.1} parent=11 // pred_check_branch
        %177 = sbr.rel (%p175) target = $region20
      $region19: #{tpu_custom_call.1} parent=11 // pred_region
        _
      $region20: #{tpu_custom_call.1} parent=11 // pred_fallthru
        _
    $region12: #{tpu_custom_call.1} parent=5 // pred_fallthru
      _
    %p178 = scmp.lt.s32.totalorder %s11, 2
    // Predicated region
    $region21: #{tpu_custom_call.1} parent=5 // pred_check
      %p179 = pneg %p178
    $region22: #{tpu_custom_call.1} parent=5 // pred_check_branch
      %181 = sbr.rel (%p179) target = $region24
    $region23: #{tpu_custom_call.1} parent=5 // pred_region
      // Predicated region
      $region25: #{tpu_custom_call.1} parent=23 // pred_check
        %p182 = pneg %p31
      $region26: #{tpu_custom_call.1} parent=23 // pred_check_branch
        %184 = sbr.rel (%p182) target = $region28
      $region27: #{tpu_custom_call.1} parent=23 // pred_region
        %p185 = scmp.lt.s32.totalorder %s11, 1
        %s186 = scalar_select %p185, %s11, 1
        %s187 = smul.addr %s186, 8
        %s188 = smul.addr %s187, 2
        %s189 = scalar_lea.vmem %s0, %s188
      $region28: #{tpu_custom_call.1} parent=23 // pred_fallthru
        _
      // Predicated region
      $region29: #{tpu_custom_call.1} parent=23 // pred_check
        %p190 = pneg %p57
      $region30: #{tpu_custom_call.1} parent=23 // pred_check_branch
        %192 = sbr.rel (%p190) target = $region32
      $region31: #{tpu_custom_call.1} parent=23 // pred_region
        %p193 = scmp.lt.s32.totalorder %s11, 1
        %s194 = scalar_select %p193, %s11, 1
        %s195 = smul.addr %s194, 4
        %s196 = smul.addr %s195, 8
        %s197 = scalar_lea.vmem %s1, %s196
      $region32: #{tpu_custom_call.1} parent=23 // pred_fallthru
        _
      // Predicated region
      $region33: #{tpu_custom_call.1} parent=23 // pred_check
        %p198 = pneg %p125
      $region34: #{tpu_custom_call.1} parent=23 // pred_check_branch
        %200 = sbr.rel (%p198) target = $region36
      $region35: #{tpu_custom_call.1} parent=23 // pred_region
        %p201 = scmp.lt.s32.totalorder %s11, 1
        %s202 = scalar_select %p201, %s11, 1
        %s203 = smul.addr %s202, 4
        %s204 = smul.addr %s203, 8
        %s205 = scalar_lea.vmem %s4, %s204
      $region36: #{tpu_custom_call.1} parent=23 // pred_fallthru
        _
    $region24: #{tpu_custom_call.1} parent=5 // pred_fallthru
      _
    %p206 = scmp.le.s32.totalorder 1, %s11
    %p207 = scmp.lt.s32.totalorder %s11, 3
    %p208 = pnand %p206, %p207
    %p209 = pneg %p208
    // Predicated region
    $region37: #{tpu_custom_call.1} parent=5 // pred_check
      _
    $region38: #{tpu_custom_call.1} parent=5 // pred_check_branch
      %211 = sbr.rel (%p208) target = $region40
    $region39: #{tpu_custom_call.1} parent=5 // pred_region
      %s212 = ssub.s32 %s11, 1
      %p213 = scmp.lt.s32.totalorder %s16, 1
      %s214 = scalar_select %p213, %s16, 1
      %s215 = smul.addr %s214, 8
      %s216 = smul.addr %s215, 2
      %s217 = scalar_lea.vmem %s0, %s216
      %p218 = pneg %p37
      %p219 = pneg %p34
      %p220 = scmp.lt.s32.totalorder %s16, 1
      %s221 = scalar_select %p220, %s16, 1
      %s222 = smul.addr %s221, 4
      %s223 = smul.addr %s222, 8
      %s224 = scalar_lea.vmem %s1, %s223
      %p225 = pneg %p63
      %p226 = pneg %p60
      %p227 = pneg %p84
      %p228 = pneg %p81
      %p229 = pneg %p105
      %p230 = pneg %p102
      %p231 = scmp.lt.s32.totalorder %s16, 1
      %s232 = scalar_select %p231, %s16, 1
      %s233 = smul.addr %s232, 4
      %s234 = smul.addr %s233, 8
      %s235 = scalar_lea.vmem %s4, %s234
      %p236 = pneg %p131
      %p237 = pneg %p128
      %p238 = pneg %p157
      %p239 = pneg %p154
      %p240 = scmp.lt.s32.totalorder %s16, 1
      %s241 = scalar_select %p240, %s16, 1
      %s242 = smul.addr %s241, 4
      %s243 = smul.addr %s242, 8
      %s244 = scalar_lea.vmem %s5, %s243
      %p245 = scmp.lt.s32.totalorder %s16, 1
      %s246 = scalar_select %p245, %s16, 1
      %s247 = smul.addr %s246, 8
      %s248 = smul.addr %s247, 2
      %s249 = scalar_lea.vmem %s0, %s248
      %p250 = scmp.lt.s32.totalorder %s16, 1
      %s251 = scalar_select %p250, %s16, 1
      %s252 = smul.addr %s251, 4
      %s253 = smul.addr %s252, 8
      %s254 = scalar_lea.vmem %s1, %s253
      %p255 = scmp.lt.s32.totalorder %s16, 1
      %s256 = scalar_select %p255, %s16, 1
      %s257 = smul.addr %s256, 4
      %s258 = smul.addr %s257, 8
      %s259 = scalar_lea.vmem %s4, %s258
      %p260 = scmp.lt.s32.totalorder %s16, 1
      %s261 = scalar_select %p260, %s16, 1
      %s262 = smul.addr %s261, 4
      %s263 = smul.addr %s262, 8
      %s264 = scalar_lea.vmem %s5, %s263
      %v265 = vld [vmem:[%s249] sm:$0xff]
      %v266 = vld [vmem:[%s249 + $0x8] sm:$0xff]
      %v267 = vld [vmem:[%s2] sm:$0xff]
      %v268 = vld [vmem:[%s2 + $0x8] sm:$0xff]
      %v269 = vld [vmem:[%s2 + $0x10] sm:$0xff]
      %v270 = vld [vmem:[%s2 + $0x18] sm:$0xff]
      %v271 = vld [vmem:[%s2 + $0x20] sm:$0xff]
      %v272 = vld [vmem:[%s2 + $0x28] sm:$0xff]
      %v273 = vld [vmem:[%s2 + $0x30] sm:$0xff]
      %v274 = vld [vmem:[%s2 + $0x38] sm:$0xff]
      %v275 = vld [vmem:[%s2 + $0x40] sm:$0xff]
      %v276 = vld [vmem:[%s2 + $0x48] sm:$0xff]
      %v277 = vld [vmem:[%s2 + $0x50] sm:$0xff]
      %v278 = vld [vmem:[%s2 + $0x58] sm:$0xff]
      %v279 = vld [vmem:[%s2 + $0x60] sm:$0xff]
      %v280 = vld [vmem:[%s2 + $0x68] sm:$0xff]
      %v281 = vld [vmem:[%s2 + $0x70] sm:$0xff]
      %v282 = vld [vmem:[%s2 + $0x78] sm:$0xff]
      %v283 = vld [vmem:[%s2 + $0x80] sm:$0xff]
      %v284 = vld [vmem:[%s2 + $0x88] sm:$0xff]
      %v285 = vld [vmem:[%s2 + $0x90] sm:$0xff]
      %v286 = vld [vmem:[%s2 + $0x98] sm:$0xff]
      %v287 = vld [vmem:[%s2 + $0xa0] sm:$0xff]
      %v288 = vld [vmem:[%s2 + $0xa8] sm:$0xff]
      %v289 = vld [vmem:[%s2 + $0xb0] sm:$0xff]
      %v290 = vld [vmem:[%s2 + $0xb8] sm:$0xff]
      %v291 = vld [vmem:[%s2 + $0xc0] sm:$0xff]
      %v292 = vld [vmem:[%s2 + $0xc8] sm:$0xff]
      %v293 = vld [vmem:[%s2 + $0xd0] sm:$0xff]
      %v294 = vld [vmem:[%s2 + $0xd8] sm:$0xff]
      %v295 = vld [vmem:[%s2 + $0xe0] sm:$0xff]
      %v296 = vld [vmem:[%s2 + $0xe8] sm:$0xff]
      %v297 = vld [vmem:[%s2 + $0xf0] sm:$0xff]
      %v298 = vld [vmem:[%s2 + $0xf8] sm:$0xff]
      %v299 = vld [vmem:[%s2 + $0x100] sm:$0xff]
      %v300 = vld [vmem:[%s2 + $0x108] sm:$0xff]
      %v301 = vld [vmem:[%s2 + $0x110] sm:$0xff]
      %v302 = vld [vmem:[%s2 + $0x118] sm:$0xff]
      %v303 = vld [vmem:[%s2 + $0x120] sm:$0xff]
      %v304 = vld [vmem:[%s2 + $0x128] sm:$0xff]
      %v305 = vld [vmem:[%s2 + $0x130] sm:$0xff]
      %v306 = vld [vmem:[%s2 + $0x138] sm:$0xff]
      %v307 = vld [vmem:[%s2 + $0x140] sm:$0xff]
      %v308 = vld [vmem:[%s2 + $0x148] sm:$0xff]
      %v309 = vld [vmem:[%s2 + $0x150] sm:$0xff]
      %v310 = vld [vmem:[%s2 + $0x158] sm:$0xff]
      %v311 = vld [vmem:[%s2 + $0x160] sm:$0xff]
      %v312 = vld [vmem:[%s2 + $0x168] sm:$0xff]
      %v313 = vld [vmem:[%s2 + $0x170] sm:$0xff]
      %v314 = vld [vmem:[%s2 + $0x178] sm:$0xff]
      %v315 = vld [vmem:[%s2 + $0x180] sm:$0xff]
      %v316 = vld [vmem:[%s2 + $0x188] sm:$0xff]
      %v317 = vld [vmem:[%s2 + $0x190] sm:$0xff]
      %v318 = vld [vmem:[%s2 + $0x198] sm:$0xff]
      %v319 = vld [vmem:[%s2 + $0x1a0] sm:$0xff]
      %v320 = vld [vmem:[%s2 + $0x1a8] sm:$0xff]
      %v321 = vld [vmem:[%s2 + $0x1b0] sm:$0xff]
      %v322 = vld [vmem:[%s2 + $0x1b8] sm:$0xff]
      %v323 = vld [vmem:[%s2 + $0x1c0] sm:$0xff]
      %v324 = vld [vmem:[%s2 + $0x1c8] sm:$0xff]
      %v325 = vld [vmem:[%s2 + $0x1d0] sm:$0xff]
      %v326 = vld [vmem:[%s2 + $0x1d8] sm:$0xff]
      %v327 = vld [vmem:[%s2 + $0x1e0] sm:$0xff]
      %v328 = vld [vmem:[%s2 + $0x1e8] sm:$0xff]
      %v329 = vld [vmem:[%s2 + $0x1f0] sm:$0xff]
      %v330 = vld [vmem:[%s2 + $0x1f8] sm:$0xff]
      %v331 = vld [vmem:[%s2 + $0x200] sm:$0xff]
      %v332 = vld [vmem:[%s2 + $0x208] sm:$0xff]
      %v333 = vld [vmem:[%s2 + $0x210] sm:$0xff]
      %v334 = vld [vmem:[%s2 + $0x218] sm:$0xff]
      %v335 = vld [vmem:[%s2 + $0x220] sm:$0xff]
      %v336 = vld [vmem:[%s2 + $0x228] sm:$0xff]
      %v337 = vld [vmem:[%s2 + $0x230] sm:$0xff]
      %v338 = vld [vmem:[%s2 + $0x238] sm:$0xff]
      %v339 = vld [vmem:[%s2 + $0x240] sm:$0xff]
      %v340 = vld [vmem:[%s2 + $0x248] sm:$0xff]
      %v341 = vld [vmem:[%s2 + $0x250] sm:$0xff]
      %v342 = vld [vmem:[%s2 + $0x258] sm:$0xff]
      %v343 = vld [vmem:[%s2 + $0x260] sm:$0xff]
      %v344 = vld [vmem:[%s2 + $0x268] sm:$0xff]
      %v345 = vld [vmem:[%s2 + $0x270] sm:$0xff]
      %v346 = vld [vmem:[%s2 + $0x278] sm:$0xff]
      %v347 = vld [vmem:[%s2 + $0x280] sm:$0xff]
      %v348 = vld [vmem:[%s2 + $0x288] sm:$0xff]
      %v349 = vld [vmem:[%s2 + $0x290] sm:$0xff]
      %v350 = vld [vmem:[%s2 + $0x298] sm:$0xff]
      %v351 = vld [vmem:[%s2 + $0x2a0] sm:$0xff]
      %v352 = vld [vmem:[%s2 + $0x2a8] sm:$0xff]
      %v353 = vld [vmem:[%s2 + $0x2b0] sm:$0xff]
      %v354 = vld [vmem:[%s2 + $0x2b8] sm:$0xff]
      %v355 = vld [vmem:[%s2 + $0x2c0] sm:$0xff]
      %v356 = vld [vmem:[%s2 + $0x2c8] sm:$0xff]
      %v357 = vld [vmem:[%s2 + $0x2d0] sm:$0xff]
      %v358 = vld [vmem:[%s2 + $0x2d8] sm:$0xff]
      %v359 = vld [vmem:[%s2 + $0x2e0] sm:$0xff]
      %v360 = vld [vmem:[%s2 + $0x2e8] sm:$0xff]
      %v361 = vld [vmem:[%s2 + $0x2f0] sm:$0xff]
      %v362 = vld [vmem:[%s2 + $0x2f8] sm:$0xff]
      %v363 = vld [vmem:[%s2 + $0x300] sm:$0xff]
      %v364 = vld [vmem:[%s2 + $0x308] sm:$0xff]
      %v365 = vld [vmem:[%s2 + $0x310] sm:$0xff]
      %v366 = vld [vmem:[%s2 + $0x318] sm:$0xff]
      %v367 = vld [vmem:[%s2 + $0x320] sm:$0xff]
      %v368 = vld [vmem:[%s2 + $0x328] sm:$0xff]
      %v369 = vld [vmem:[%s2 + $0x330] sm:$0xff]
      %v370 = vld [vmem:[%s2 + $0x338] sm:$0xff]
      %v371 = vld [vmem:[%s2 + $0x340] sm:$0xff]
      %v372 = vld [vmem:[%s2 + $0x348] sm:$0xff]
      %v373 = vld [vmem:[%s2 + $0x350] sm:$0xff]
      %v374 = vld [vmem:[%s2 + $0x358] sm:$0xff]
      %v375 = vld [vmem:[%s2 + $0x360] sm:$0xff]
      %v376 = vld [vmem:[%s2 + $0x368] sm:$0xff]
      %v377 = vld [vmem:[%s2 + $0x370] sm:$0xff]
      %v378 = vld [vmem:[%s2 + $0x378] sm:$0xff]
      %v379 = vld [vmem:[%s2 + $0x380] sm:$0xff]
      %v380 = vld [vmem:[%s2 + $0x388] sm:$0xff]
      %v381 = vld [vmem:[%s2 + $0x390] sm:$0xff]
      %v382 = vld [vmem:[%s2 + $0x398] sm:$0xff]
      %v383 = vld [vmem:[%s2 + $0x3a0] sm:$0xff]
      %v384 = vld [vmem:[%s2 + $0x3a8] sm:$0xff]
      %v385 = vld [vmem:[%s2 + $0x3b0] sm:$0xff]
      %v386 = vld [vmem:[%s2 + $0x3b8] sm:$0xff]
      %v387 = vld [vmem:[%s2 + $0x3c0] sm:$0xff]
      %v388 = vld [vmem:[%s2 + $0x3c8] sm:$0xff]
      %v389 = vld [vmem:[%s2 + $0x3d0] sm:$0xff]
      %v390 = vld [vmem:[%s2 + $0x3d8] sm:$0xff]
      %v391 = vld [vmem:[%s2 + $0x3e0] sm:$0xff]
      %v392 = vld [vmem:[%s2 + $0x3e8] sm:$0xff]
      %v393 = vld [vmem:[%s2 + $0x3f0] sm:$0xff]
      %v394 = vld [vmem:[%s2 + $0x3f8] sm:$0xff]
      %v397 = vcombine.high %v265, %v265
      %v399 = vunpack.c.l.s4 1983009808
      %v400 = vunpack.c.0.s8 %v399
      %v401 = vlaneseq
      %v402 = vshrl.u32 %v401, 7
      %v403 = vsub.s32 %v400, %v402
      %v404 = vrot.slane %v265, %v403
      %v406 = vunpack.c.l.s4 1983009808
      %v407 = vunpack.c.0.s8 %v406
      %v408 = vlaneseq
      %v409 = vshrl.u32 %v408, 7
      %v410 = vsub.s32 %v407, %v409
      %v411 = vrot.slane %v397, %v410
      %v412 = vcombine.high %v404, %v404
      %v413 = vcombine.high %v411, %v411
      %v414 = vcombine.high %v266, %v266
      %v416 = vunpack.c.l.s4 1983009808
      %v417 = vunpack.c.0.s8 %v416
      %v418 = vlaneseq
      %v419 = vshrl.u32 %v418, 7
      %v420 = vsub.s32 %v417, %v419
      %v421 = vrot.slane %v266, %v420
      %v423 = vunpack.c.l.s4 1983009808
      %v424 = vunpack.c.0.s8 %v423
      %v425 = vlaneseq
      %v426 = vshrl.u32 %v425, 7
      %v427 = vsub.s32 %v424, %v426
      %v428 = vrot.slane %v414, %v427
      %v429 = vcombine.high %v421, %v421
      %v430 = vcombine.high %v428, %v428
      %439 = vmatprep.subr.mxu0 0.0
      %440 = vmatpush1.msra.mxu0 %v267
      %441 = vmatprep.subr.mxu0 0.0
      %442 = vmatpush1.msra.mxu0 %v268
      %443 = vmatprep.subr.mxu0 0.0
      %444 = vmatpush1.msra.mxu0 %v269
      %445 = vmatprep.subr.mxu0 0.0
      %446 = vmatpush1.msra.mxu0 %v270
      %447 = vmatprep.subr.mxu0 0.0
      %448 = vmatpush1.msra.mxu0 %v271
      %449 = vmatprep.subr.mxu0 0.0
      %450 = vmatpush1.msra.mxu0 %v272
      %451 = vmatprep.subr.mxu0 0.0
      %452 = vmatpush1.msra.mxu0 %v273
      %453 = vmatprep.subr.mxu0 0.0
      %454 = vmatpush1.msra.mxu0 %v274
      %455 = vmatprep.subr.mxu0 0.0
      %456 = vmatpush1.msra.mxu0 %v275
      %457 = vmatprep.subr.mxu0 0.0
      %458 = vmatpush1.msra.mxu0 %v276
      %459 = vmatprep.subr.mxu0 0.0
      %460 = vmatpush1.msra.mxu0 %v277
      %461 = vmatprep.subr.mxu0 0.0
      %462 = vmatpush1.msra.mxu0 %v278
      %463 = vmatprep.subr.mxu0 0.0
      %464 = vmatpush1.msra.mxu0 %v279
      %465 = vmatprep.subr.mxu0 0.0
      %466 = vmatpush1.msra.mxu0 %v280
      %467 = vmatprep.subr.mxu0 0.0
      %468 = vmatpush1.msra.mxu0 %v281
      %469 = vmatprep.subr.mxu0 0.0
      %470 = vmatpush1.msra.mxu0 %v282
      %471 = vmatprep.subr.mxu0 0.0
      %472 = vmatpush1.msra.mxu0 %v283
      %473 = vmatprep.subr.mxu0 0.0
      %474 = vmatpush1.msra.mxu0 %v284
      %475 = vmatprep.subr.mxu0 0.0
      %476 = vmatpush1.msra.mxu0 %v285
      %477 = vmatprep.subr.mxu0 0.0
      %478 = vmatpush1.msra.mxu0 %v286
      %479 = vmatprep.subr.mxu0 0.0
      %480 = vmatpush1.msra.mxu0 %v287
      %481 = vmatprep.subr.mxu0 0.0
      %482 = vmatpush1.msra.mxu0 %v288
      %483 = vmatprep.subr.mxu0 0.0
      %484 = vmatpush1.msra.mxu0 %v289
      %485 = vmatprep.subr.mxu0 0.0
      %486 = vmatpush1.msra.mxu0 %v290
      %487 = vmatprep.subr.mxu0 0.0
      %488 = vmatpush1.msra.mxu0 %v291
      %489 = vmatprep.subr.mxu0 0.0
      %490 = vmatpush1.msra.mxu0 %v292
      %491 = vmatprep.subr.mxu0 0.0
      %492 = vmatpush1.msra.mxu0 %v293
      %493 = vmatprep.subr.mxu0 0.0
      %494 = vmatpush1.msra.mxu0 %v294
      %495 = vmatprep.subr.mxu0 0.0
      %496 = vmatpush1.msra.mxu0 %v295
      %497 = vmatprep.subr.mxu0 0.0
      %498 = vmatpush1.msra.mxu0 %v296
      %499 = vmatprep.subr.mxu0 0.0
      %500 = vmatpush1.msra.mxu0 %v297
      %501 = vmatprep.subr.mxu0 0.0
      %502 = vmatpush1.msra.mxu0 %v298
      %503 = vmatprep.mubr.f32.mxu0 %v412
      %504 = vmatmul.mubr.f32.gmra.mrb[0].mxu0 %v404
      %v505 = vpop.f32.mrb[0].mxu0
      %v506 = vadd.f32 0.0, %v505
      %v507 = vpop.f32.mrb[0].mxu0
      %508 = vdwg.mxu0
      %509 = vmatprep.subr.mxu0 0.0
      %510 = vmatpush1.msra.mxu0 %v299
      %511 = vmatprep.subr.mxu0 0.0
      %512 = vmatpush1.msra.mxu0 %v300
      %513 = vmatprep.subr.mxu0 0.0
      %514 = vmatpush1.msra.mxu0 %v301
      %515 = vmatprep.subr.mxu0 0.0
      %516 = vmatpush1.msra.mxu0 %v302
      %517 = vmatprep.subr.mxu0 0.0
      %518 = vmatpush1.msra.mxu0 %v303
      %519 = vmatprep.subr.mxu0 0.0
      %520 = vmatpush1.msra.mxu0 %v304
      %521 = vmatprep.subr.mxu0 0.0
      %522 = vmatpush1.msra.mxu0 %v305
      %523 = vmatprep.subr.mxu0 0.0
      %524 = vmatpush1.msra.mxu0 %v306
      %525 = vmatprep.subr.mxu0 0.0
      %526 = vmatpush1.msra.mxu0 %v307
      %527 = vmatprep.subr.mxu0 0.0
      %528 = vmatpush1.msra.mxu0 %v308
      %529 = vmatprep.subr.mxu0 0.0
      %530 = vmatpush1.msra.mxu0 %v309
      %531 = vmatprep.subr.mxu0 0.0
      %532 = vmatpush1.msra.mxu0 %v310
      %533 = vmatprep.subr.mxu0 0.0
      %534 = vmatpush1.msra.mxu0 %v311
      %535 = vmatprep.subr.mxu0 0.0
      %536 = vmatpush1.msra.mxu0 %v312
      %537 = vmatprep.subr.mxu0 0.0
      %538 = vmatpush1.msra.mxu0 %v313
      %539 = vmatprep.subr.mxu0 0.0
      %540 = vmatpush1.msra.mxu0 %v314
      %541 = vmatprep.subr.mxu0 0.0
      %542 = vmatpush1.msra.mxu0 %v315
      %543 = vmatprep.subr.mxu0 0.0
      %544 = vmatpush1.msra.mxu0 %v316
      %545 = vmatprep.subr.mxu0 0.0
      %546 = vmatpush1.msra.mxu0 %v317
      %547 = vmatprep.subr.mxu0 0.0
      %548 = vmatpush1.msra.mxu0 %v318
      %549 = vmatprep.subr.mxu0 0.0
      %550 = vmatpush1.msra.mxu0 %v319
      %551 = vmatprep.subr.mxu0 0.0
      %552 = vmatpush1.msra.mxu0 %v320
      %553 = vmatprep.subr.mxu0 0.0
      %554 = vmatpush1.msra.mxu0 %v321
      %555 = vmatprep.subr.mxu0 0.0
      %556 = vmatpush1.msra.mxu0 %v322
      %557 = vmatprep.subr.mxu0 0.0
      %558 = vmatpush1.msra.mxu0 %v323
      %559 = vmatprep.subr.mxu0 0.0
      %560 = vmatpush1.msra.mxu0 %v324
      %561 = vmatprep.subr.mxu0 0.0
      %562 = vmatpush1.msra.mxu0 %v325
      %563 = vmatprep.subr.mxu0 0.0
      %564 = vmatpush1.msra.mxu0 %v326
      %565 = vmatprep.subr.mxu0 0.0
      %566 = vmatpush1.msra.mxu0 %v327
      %567 = vmatprep.subr.mxu0 0.0
      %568 = vmatpush1.msra.mxu0 %v328
      %569 = vmatprep.subr.mxu0 0.0
      %570 = vmatpush1.msra.mxu0 %v329
      %571 = vmatprep.subr.mxu0 0.0
      %572 = vmatpush1.msra.mxu0 %v330
      %573 = vmatprep.mubr.f32.mxu0 %v413
      %574 = vmatmul.mubr.f32.gmra.mrb[0].mxu0 %v411
      %v575 = vpop.f32.mrb[0].mxu0
      %v576 = vadd.f32 %v506, %v575
      %v577 = vpop.f32.mrb[0].mxu0
      %578 = vdwg.mxu0
      %579 = vmatprep.subr.mxu0 0.0
      %580 = vmatpush1.msra.mxu0 %v331
      %581 = vmatprep.subr.mxu0 0.0
      %582 = vmatpush1.msra.mxu0 %v332
      %583 = vmatprep.subr.mxu0 0.0
      %584 = vmatpush1.msra.mxu0 %v333
      %585 = vmatprep.subr.mxu0 0.0
      %586 = vmatpush1.msra.mxu0 %v334
      %587 = vmatprep.subr.mxu0 0.0
      %588 = vmatpush1.msra.mxu0 %v335
      %589 = vmatprep.subr.mxu0 0.0
      %590 = vmatpush1.msra.mxu0 %v336
      %591 = vmatprep.subr.mxu0 0.0
      %592 = vmatpush1.msra.mxu0 %v337
      %593 = vmatprep.subr.mxu0 0.0
      %594 = vmatpush1.msra.mxu0 %v338
      %595 = vmatprep.subr.mxu0 0.0
      %596 = vmatpush1.msra.mxu0 %v339
      %597 = vmatprep.subr.mxu0 0.0
      %598 = vmatpush1.msra.mxu0 %v340
      %599 = vmatprep.subr.mxu0 0.0
      %600 = vmatpush1.msra.mxu0 %v341
      %601 = vmatprep.subr.mxu0 0.0
      %602 = vmatpush1.msra.mxu0 %v342
      %603 = vmatprep.subr.mxu0 0.0
      %604 = vmatpush1.msra.mxu0 %v343
      %605 = vmatprep.subr.mxu0 0.0
      %606 = vmatpush1.msra.mxu0 %v344
      %607 = vmatprep.subr.mxu0 0.0
      %608 = vmatpush1.msra.mxu0 %v345
      %609 = vmatprep.subr.mxu0 0.0
      %610 = vmatpush1.msra.mxu0 %v346
      %611 = vmatprep.subr.mxu0 0.0
      %612 = vmatpush1.msra.mxu0 %v347
      %613 = vmatprep.subr.mxu0 0.0
      %614 = vmatpush1.msra.mxu0 %v348
      %615 = vmatprep.subr.mxu0 0.0
      %616 = vmatpush1.msra.mxu0 %v349
      %617 = vmatprep.subr.mxu0 0.0
      %618 = vmatpush1.msra.mxu0 %v350
      %619 = vmatprep.subr.mxu0 0.0
      %620 = vmatpush1.msra.mxu0 %v351
      %621 = vmatprep.subr.mxu0 0.0
      %622 = vmatpush1.msra.mxu0 %v352
      %623 = vmatprep.subr.mxu0 0.0
      %624 = vmatpush1.msra.mxu0 %v353
      %625 = vmatprep.subr.mxu0 0.0
      %626 = vmatpush1.msra.mxu0 %v354
      %627 = vmatprep.subr.mxu0 0.0
      %628 = vmatpush1.msra.mxu0 %v355
      %629 = vmatprep.subr.mxu0 0.0
      %630 = vmatpush1.msra.mxu0 %v356
      %631 = vmatprep.subr.mxu0 0.0
      %632 = vmatpush1.msra.mxu0 %v357
      %633 = vmatprep.subr.mxu0 0.0
      %634 = vmatpush1.msra.mxu0 %v358
      %635 = vmatprep.subr.mxu0 0.0
      %636 = vmatpush1.msra.mxu0 %v359
      %637 = vmatprep.subr.mxu0 0.0
      %638 = vmatpush1.msra.mxu0 %v360
      %639 = vmatprep.subr.mxu0 0.0
      %640 = vmatpush1.msra.mxu0 %v361
      %641 = vmatprep.subr.mxu0 0.0
      %642 = vmatpush1.msra.mxu0 %v362
      %643 = vmatprep.mubr.f32.mxu0 %v429
      %644 = vmatmul.mubr.f32.gmra.mrb[0].mxu0 %v421
      %v645 = vpop.f32.mrb[0].mxu0
      %v646 = vadd.f32 %v576, %v645
      %v647 = vpop.f32.mrb[0].mxu0
      %648 = vdwg.mxu0
      %649 = vmatprep.subr.mxu0 0.0
      %650 = vmatpush1.msra.mxu0 %v363
      %651 = vmatprep.subr.mxu0 0.0
      %652 = vmatpush1.msra.mxu0 %v364
      %653 = vmatprep.subr.mxu0 0.0
      %654 = vmatpush1.msra.mxu0 %v365
      %655 = vmatprep.subr.mxu0 0.0
      %656 = vmatpush1.msra.mxu0 %v366
      %657 = vmatprep.subr.mxu0 0.0
      %658 = vmatpush1.msra.mxu0 %v367
      %659 = vmatprep.subr.mxu0 0.0
      %660 = vmatpush1.msra.mxu0 %v368
      %661 = vmatprep.subr.mxu0 0.0
      %662 = vmatpush1.msra.mxu0 %v369
      %663 = vmatprep.subr.mxu0 0.0
      %664 = vmatpush1.msra.mxu0 %v370
      %665 = vmatprep.subr.mxu0 0.0
      %666 = vmatpush1.msra.mxu0 %v371
      %667 = vmatprep.subr.mxu0 0.0
      %668 = vmatpush1.msra.mxu0 %v372
      %669 = vmatprep.subr.mxu0 0.0
      %670 = vmatpush1.msra.mxu0 %v373
      %671 = vmatprep.subr.mxu0 0.0
      %672 = vmatpush1.msra.mxu0 %v374
      %673 = vmatprep.subr.mxu0 0.0
      %674 = vmatpush1.msra.mxu0 %v375
      %675 = vmatprep.subr.mxu0 0.0
      %676 = vmatpush1.msra.mxu0 %v376
      %677 = vmatprep.subr.mxu0 0.0
      %678 = vmatpush1.msra.mxu0 %v377
      %679 = vmatprep.subr.mxu0 0.0
      %680 = vmatpush1.msra.mxu0 %v378
      %681 = vmatprep.subr.mxu0 0.0
      %682 = vmatpush1.msra.mxu0 %v379
      %683 = vmatprep.subr.mxu0 0.0
      %684 = vmatpush1.msra.mxu0 %v380
      %685 = vmatprep.subr.mxu0 0.0
      %686 = vmatpush1.msra.mxu0 %v381
      %687 = vmatprep.subr.mxu0 0.0
      %688 = vmatpush1.msra.mxu0 %v382
      %689 = vmatprep.subr.mxu0 0.0
      %690 = vmatpush1.msra.mxu0 %v383
      %691 = vmatprep.subr.mxu0 0.0
      %692 = vmatpush1.msra.mxu0 %v384
      %693 = vmatprep.subr.mxu0 0.0
      %694 = vmatpush1.msra.mxu0 %v385
      %695 = vmatprep.subr.mxu0 0.0
      %696 = vmatpush1.msra.mxu0 %v386
      %697 = vmatprep.subr.mxu0 0.0
      %698 = vmatpush1.msra.mxu0 %v387
      %699 = vmatprep.subr.mxu0 0.0
      %700 = vmatpush1.msra.mxu0 %v388
      %701 = vmatprep.subr.mxu0 0.0
      %702 = vmatpush1.msra.mxu0 %v389
      %703 = vmatprep.subr.mxu0 0.0
      %704 = vmatpush1.msra.mxu0 %v390
      %705 = vmatprep.subr.mxu0 0.0
      %706 = vmatpush1.msra.mxu0 %v391
      %707 = vmatprep.subr.mxu0 0.0
      %708 = vmatpush1.msra.mxu0 %v392
      %709 = vmatprep.subr.mxu0 0.0
      %710 = vmatpush1.msra.mxu0 %v393
      %711 = vmatprep.subr.mxu0 0.0
      %712 = vmatpush1.msra.mxu0 %v394
      %713 = vmatprep.mubr.f32.mxu0 %v430
      %714 = vmatmul.mubr.f32.gmra.mrb[0].mxu0 %v428
      %v715 = vpop.f32.mrb[0].mxu0
      %v716 = vadd.f32 %v646, %v715
      %v717 = vpop.f32.mrb[0].mxu0
      %718 = vdwg.mxu0
      %v719 = vld [vmem:[%s3] sm:$0xff]
      %v720 = vld [vmem:[%s3 + $0x8] sm:$0xff]
      %v721 = vld [vmem:[%s3 + $0x10] sm:$0xff]
      %v722 = vld [vmem:[%s3 + $0x18] sm:$0x3f]
      %724 = vset.pattern.permute.xlu0 0
      %725 = vperm.xlu0 %724, %v719
      %v726 = vpop.permute.xlu0 %725
      %729 = vset.pattern.permute.xlu0 0
      %730 = vperm.xlu0 %729, %v720
      %v731 = vpop.permute.xlu0 %730
      %734 = vset.pattern.permute.xlu0 0
      %735 = vperm.xlu0 %734, %v721
      %v736 = vpop.permute.xlu0 %735
      %739 = vset.pattern.permute.xlu0 0
      %740 = vperm.xlu0 %739, %v722
      %v741 = vpop.permute.xlu0 %740
      %v743 = vlaneseq
      %v744 = vshrl.u32 %v743, 7
      %v745 = vsub.s32 0, %v744
      %v746 = vrot.slane %v716, %v745
      %v747 = vmul.f32 %v726, %v746
      %v748 = vmul.f32 %v731, %v746
      %v749 = vmul.f32 %v736, %v746
      %v750 = vmul.f32 %v741, %v746
      %751 = vset.pattern.permute.xlu0 1
      %752 = vperm.xlu0 %751, %v719
      %v753 = vpop.permute.xlu0 %752
      %755 = vset.pattern.permute.xlu0 1
      %756 = vperm.xlu0 %755, %v720
      %v757 = vpop.permute.xlu0 %756
      %759 = vset.pattern.permute.xlu0 1
      %760 = vperm.xlu0 %759, %v721
      %v761 = vpop.permute.xlu0 %760
      %763 = vset.pattern.permute.xlu0 1
      %764 = vperm.xlu0 %763, %v722
      %v765 = vpop.permute.xlu0 %764
      %v767 = vlaneseq
      %v768 = vshrl.u32 %v767, 7
      %v769 = vsub.s32 1, %v768
      %v770 = vrot.slane %v716, %v769
      %v771 = vmul.f32 %v753, %v770
      %v772 = vmul.f32 %v757, %v770
      %v773 = vmul.f32 %v761, %v770
      %v774 = vmul.f32 %v765, %v770
      %v775 = vadd.f32 %v747, %v771
      %v776 = vadd.f32 %v748, %v772
      %v777 = vadd.f32 %v749, %v773
      %v778 = vadd.f32 %v750, %v774
      %v779 = vld [vmem:[%s259] sm:$0xff]
      %v780 = vld [vmem:[%s259 + $0x8] sm:$0xff]
      %v781 = vld [vmem:[%s259 + $0x10] sm:$0xff]
      %v782 = vld [vmem:[%s259 + $0x18] sm:$0x3f]
      %v783 = vld [vmem:[%s254] sm:$0xff]
      %v784 = vld [vmem:[%s254 + $0x8] sm:$0xff]
      %v785 = vld [vmem:[%s254 + $0x10] sm:$0xff]
      %v786 = vld [vmem:[%s254 + $0x18] sm:$0x3f]
      %791 = vrot.lane.b32.xlu0 %v783, 32
      %v792 = vpop.permute.xlu0 %791
      %793 = vrot.lane.b32.xlu0 %v784, 32
      %v794 = vpop.permute.xlu0 %793
      %795 = vrot.lane.b32.xlu0 %v785, 32
      %v796 = vpop.permute.xlu0 %795
      %797 = vrot.lane.b32.xlu0 %v786, 32
      %v798 = vpop.permute.xlu0 %797
      %vm803 = vcmask 261120
      %v804 = vsel %vm803, %v775, %v792
      %v805 = vsel %vm803, %v776, %v794
      %v806 = vsel %vm803, %v777, %v796
      %v807 = vsel %vm803, %v778, %v798
      %809 = vset.pattern.permute.xlu0 0
      %810 = vperm.xlu0 %809, %v779
      %v811 = vpop.permute.xlu0 %810
      %814 = vset.pattern.permute.xlu0 0
      %815 = vperm.xlu0 %814, %v780
      %v816 = vpop.permute.xlu0 %815
      %819 = vset.pattern.permute.xlu0 0
      %820 = vperm.xlu0 %819, %v781
      %v821 = vpop.permute.xlu0 %820
      %824 = vset.pattern.permute.xlu0 0
      %825 = vperm.xlu0 %824, %v782
      %v826 = vpop.permute.xlu0 %825
      %v828 = vmul.f32 %v804, %v811
      %v829 = vmul.f32 %v805, %v816
      %v830 = vmul.f32 %v806, %v821
      %v831 = vmul.f32 %v807, %v826
      %vm832 = vcmask 523264
      %833 = vst.msk [vmem:[%s264] sm:$0xff] %vm832, %v828
      %834 = vst.msk [vmem:[%s264 + $0x8] sm:$0xff] %vm832, %v829
      %835 = vst.msk [vmem:[%s264 + $0x10] sm:$0xff] %vm832, %v830
      %vm836 = vcmask 521216
      %837 = vst.msk [vmem:[%s264 + $0x18] sm:$0x3f] %vm836, %v831
      %p838 = scmp.lt.s32.totalorder %s16, 1
      %s839 = scalar_select %p838, %s16, 1
      %s840 = smul.addr %s839, 4
      %s841 = smul.addr %s840, 8
      %s842 = scalar_lea.vmem %s5, %s841
      // Predicated region
      $region41: #{tpu_custom_call.1} parent=39 // pred_check
        %p843 = pneg %p154
      $region42: #{tpu_custom_call.1} parent=39 // pred_check_branch
        %845 = sbr.rel (%p843) target = $region44
      $region43: #{tpu_custom_call.1} parent=39 // pred_region
        _
      $region44: #{tpu_custom_call.1} parent=39 // pred_fallthru
        _
    $region40: #{tpu_custom_call.1} parent=5 // pred_fallthru
      _
    %p846 = scmp.le.s32.totalorder 2, %s11
    // Predicated region
    $region45: #{tpu_custom_call.1} parent=5 // pred_check
      %p847 = pneg %p846
    $region46: #{tpu_custom_call.1} parent=5 // pred_check_branch
      %849 = sbr.rel (%p847) target = $region48
    $region47: #{tpu_custom_call.1} parent=5 // pred_region
      %s850 = ssub.s32 %s11, 2
      // Predicated region
      $region49: #{tpu_custom_call.1} parent=47 // pred_check
        %p851 = pneg %p160
      $region50: #{tpu_custom_call.1} parent=47 // pred_check_branch
        %853 = sbr.rel (%p851) target = $region52
      $region51: #{tpu_custom_call.1} parent=47 // pred_region
        %p854 = scmp.lt.s32.totalorder %s17, 1
        %s855 = scalar_select %p854, %s17, 1
        %s856 = smul.addr %s855, 4
        %s857 = smul.addr %s856, 8
        %s858 = scalar_lea.vmem %s5, %s857
      $region52: #{tpu_custom_call.1} parent=47 // pred_fallthru
        _
    $region48: #{tpu_custom_call.1} parent=5 // pred_fallthru
      _
  $region6: #{tpu_custom_call.1} parent=0 // loop_footer
    %s15 = sadd.s32 1, %s11
  $region7: #{tpu_custom_call.1} parent=0 // loop_footer_branch
    %10 = sbr.rel target = $region3
  $region8: #{tpu_custom_call.1} parent=0 // loop_exit
    _

</llo_original>
